<compile_context>
chip_gen: v6e
topology: v6e:2x2x1
jax: 0.10.0
libtpu: 0.0.40
codegen_flags: <defaults>
</compile_context>

<pallas_src>
import jax
import jax.numpy as jnp
from jax.experimental import pallas as pl
from jax.experimental.pallas import tpu as pltpu

EPS = 1e-5                      # PyTorch BatchNorm2d default
LANE = 128
VMEM_LIMIT = 48 * 1024 * 1024   # scoped VMEM limit passed to Mosaic
VMEM_BUDGET = 40 * 1024 * 1024  # target working set used for tile sizing


def _round_up(a, b):
    return (a + b - 1) // b * b


def _pick_tile(M, K, Cout):
    # Double-buffered per-step working set (pass 1 dominates):
    #   patches in : 2 * K*T*2 (bf16)      zmm out : 2 * 2*Cout*T*2 (bf16)
    #   weights    : Cout*K*2              f32 temps (z, z*z): ~2*Cout*T*4
    def p1(t):
        return 2 * K * t * 2 + 2 * 2 * Cout * t * 2 + Cout * K * 2 + 2 * Cout * t * 4

    def p2(t):
        return 2 * 2 * Cout * t * 2 + 2 * Cout * t * 4 + 2 * Cout * t * 4

    tile = LANE
    for cand in (2048, 1024, 512, 256, 128):
        if max(p1(cand), p2(cand)) <= VMEM_BUDGET:
            tile = cand
            break
    return min(tile, _round_up(M, LANE))   # do not over-pad tiny problems


def down_block(x_nchw, w_oihw, bias, gamma, beta, *, compute_dtype=jnp.bfloat16):
    N, Cin, H, W = x_nchw.shape
    Cout = w_oihw.shape[0]
    assert H % 2 == 0 and W % 2 == 0
    Ho, Wo = H // 2, W // 2
    M = N * Ho * Wo                 # pooled pixels; conv pixels = 4*M
    K = 9 * Cin
    TILE = _pick_tile(M, K, Cout)
    Mp = _round_up(M, TILE)
    T = Mp // TILE
    n_conv_px = 4.0 * M

    # ------------- glue: im2col into transposed, pool-member-blocked layout -------------
    # patches_T[p, (kh*3+kw)*Cin + c, col(n,i,j)] = padded_x[n, 2i+dh+kh, 2j+dw+kw, c]
    # with p = 2*dh + dw; pixel columns are lane-dense and zero-padded to Mp.
    # TODO(synk): replace with an implicit-GEMM (halo-tiled) path to avoid the 9x expansion.
    x = jnp.transpose(x_nchw, (0, 2, 3, 1))               # NHWC
    xp = jnp.pad(x, ((0, 0), (1, 1), (1, 1), (0, 0)))     # conv padding = 1
    blocks = []
    for dh in range(2):
        for dw in range(2):
            cols = []
            for kh in range(3):
                for kw in range(3):
                    sl = xp[:, dh + kh: dh + kh + H: 2, dw + kw: dw + kw + W: 2, :]
                    cols.append(sl.reshape(M, Cin).T)      # (Cin, M)
            blocks.append(jnp.concatenate(cols, axis=0))   # (K, M)
    patches_T = jnp.stack(blocks, axis=0)                  # (4, K, M)
    if Mp != M:
        patches_T = jnp.pad(patches_T, ((0, 0), (0, 0), (0, Mp - M)))
    patches_T = patches_T.astype(compute_dtype)

    # weight as (Cout, 9*Cin), K ordered (kh, kw, cin) to match patches_T.
    w_mat = jnp.transpose(w_oihw, (0, 2, 3, 1)).reshape(Cout, K).astype(compute_dtype)
    bias_f32 = bias.astype(jnp.float32)
    bias_col = bias_f32.reshape(Cout, 1)

    # ----------- pass 1: conv(+bias), pool-member running max/min, per-tile stats -------
    def conv_stats_kernel(p_ref, w_ref, b_ref, zmm_ref, st_ref):
        # p_ref: (K, TILE) bf16 ; w_ref: (Cout, K) bf16 ; b_ref: (Cout, 1) f32
        # zmm_ref: (2, Cout, TILE) bf16 resident over p ; st_ref: (Cout, 2) f32 resident.
        p = pl.program_id(1)
        z = jnp.dot(w_ref[...], p_ref[...],
                    preferred_element_type=jnp.float32) + b_ref[...]    # (Cout, TILE) f32
        zb = z.astype(zmm_ref.dtype)

        @pl.when(p == 0)
        def _():
            zmm_ref[0] = zb
            zmm_ref[1] = zb
            st_ref[...] = jnp.zeros_like(st_ref)

        @pl.when(p > 0)
        def _():
            zmm_ref[0] = jnp.maximum(zmm_ref[0], zb)
            zmm_ref[1] = jnp.minimum(zmm_ref[1], zb)

        st_ref[...] += jnp.concatenate(
            [jnp.sum(z, axis=1, keepdims=True),
             jnp.sum(z * z, axis=1, keepdims=True)], axis=1)            # (Cout, 2)

    zmm, stats = pl.pallas_call(
        conv_stats_kernel,
        out_shape=(
            jax.ShapeDtypeStruct((2, Cout, Mp), compute_dtype),   # [0]=max_p z, [1]=min_p z
            jax.ShapeDtypeStruct((T, Cout, 2), jnp.float32),      # [:, :, 0]=sum z, 1=sum z^2
        ),
        grid=(T, 4),
        in_specs=[
            pl.BlockSpec((None, K, TILE), lambda t, p: (p, 0, t)),
            pl.BlockSpec((Cout, K), lambda t, p: (0, 0)),
            pl.BlockSpec((Cout, 1), lambda t, p: (0, 0)),
        ],
        out_specs=(
            pl.BlockSpec((2, Cout, TILE), lambda t, p: (0, 0, t)),
            pl.BlockSpec((None, Cout, 2), lambda t, p: (t, 0, 0)),
        ),
        compiler_params=pltpu.CompilerParams(
            dimension_semantics=("parallel", "arbitrary"),
            vmem_limit_bytes=VMEM_LIMIT),
    )(patches_T, w_mat, bias_col)

    # ---- tiny cross-tile reduction + BN scale/shift folding (plain JAX, f32) -----------
    sum_z = jnp.sum(stats[:, :, 0], axis=0)       # (Cout,)
    sum_z2 = jnp.sum(stats[:, :, 1], axis=0)
    if Mp != M:
        # zero-padded patch columns evaluate to exactly bias[c]; remove them analytically.
        pad = 4.0 * (Mp - M)
        sum_z = sum_z - pad * bias_f32
        sum_z2 = sum_z2 - pad * bias_f32 * bias_f32
    mean = sum_z / n_conv_px
    var = sum_z2 / n_conv_px - mean * mean        # biased variance (train-mode BN)
    scale = gamma.astype(jnp.float32) * jax.lax.rsqrt(var + EPS)
    shift = beta.astype(jnp.float32) - mean * scale
    ab = jnp.stack([scale, shift], axis=0).reshape(2, Cout, 1)

    # ------------------ pass 2: BN-affine + ReLU + MaxPool2d(2) -------------------------
    def bn_relu_pool_kernel(z_ref, ab_ref, o_ref):
        # z_ref: (2, Cout, TILE) bf16 ; ab_ref: (2, Cout, 1) f32 ; o_ref: (Cout, TILE)
        sc = ab_ref[0]                               # (Cout, 1)
        sh = ab_ref[1]
        zmax = z_ref[0].astype(jnp.float32)
        zmin = z_ref[1].astype(jnp.float32)
        zsel = jnp.where(sc >= 0.0, zmax, zmin)      # max_p(sc*z_p) = sc*zmax or sc*zmin
        o_ref[...] = jnp.maximum(zsel * sc + sh, 0.0).astype(o_ref.dtype)

    o_t = pl.pallas_call(
        bn_relu_pool_kernel,
        out_shape=jax.ShapeDtypeStruct((Cout, Mp), x_nchw.dtype),
        grid=(T,),
        in_specs=[
            pl.BlockSpec((2, Cout, TILE), lambda t: (0, 0, t)),
            pl.BlockSpec((2, Cout, 1), lambda t: (0, 0, 0)),
        ],
        out_specs=pl.BlockSpec((Cout, TILE), lambda t: (0, t)),
        compiler_params=pltpu.CompilerParams(
            dimension_semantics=("parallel",),
            vmem_limit_bytes=VMEM_LIMIT),
    )(zmm, ab)

    # columns are (n, i, j): drop lane padding and go back to NCHW.
    return o_t[:, :M].reshape(Cout, N, Ho, Wo).transpose(1, 0, 2, 3)


def reference(x, w, b, gamma, beta):
    y = jax.lax.conv_general_dilated(
        x, w, window_strides=(1, 1), padding=((1, 1), (1, 1)),
        dimension_numbers=("NCHW", "OIHW", "NCHW"))
    y = y + b.reshape(1, -1, 1, 1)
    mean = jnp.mean(y, axis=(0, 2, 3), keepdims=True)
    var = jnp.mean((y - mean) ** 2, axis=(0, 2, 3), keepdims=True)
    y = (y - mean) / jnp.sqrt(var + EPS) * gamma.reshape(1, -1, 1, 1) + beta.reshape(1, -1, 1, 1)
    y = jnp.maximum(y, 0.0)
    return jax.lax.reduce_window(y, -jnp.inf, jax.lax.max, (1, 1, 2, 2), (1, 1, 2, 2), "VALID")


if __name__ == "__main__":
    key = jax.random.PRNGKey(0)
    k_x, k_w, k_b, k_g, k_be = jax.random.split(key, 5)

    N, Cin, Cout, H, W = 2, 4, 8, 16, 16
    x = jax.random.normal(k_x, (N, Cin, H, W), jnp.float32)
    weight = 0.1 * jax.random.normal(k_w, (Cout, Cin, 3, 3), jnp.float32)   # Conv2d weight (OIHW)
    bias = 0.1 * jax.random.normal(k_b, (Cout,), jnp.float32)               # Conv2d bias
    gamma = 1.0 + 0.1 * jax.random.normal(k_g, (Cout,), jnp.float32)        # BN weight
    beta = 0.1 * jax.random.normal(k_be, (Cout,), jnp.float32)              # BN bias

    out = jax.block_until_ready(down_block(x, weight, bias, gamma, beta))
    ref = jax.block_until_ready(reference(x, weight, bias, gamma, beta))

    assert out.shape == (N, Cout, H // 2, W // 2), out.shape
    # bf16 MXU inputs + bf16 z intermediate with f32 accumulation/stats -> relaxed tolerance.
    assert jnp.allclose(out, ref, rtol=2e-2, atol=3e-2), float(jnp.max(jnp.abs(out - ref)))
    print("KERNEL_OK")
</pallas_src>

<mosaic_0001>
module attributes {stable_mosaic.version = 11 : i64} {
  func.func @conv_stats_kernel(%arg0: i32, %arg1: i32, %arg2: memref<1x36x128xbf16, #tpu.memory_space<vmem>>, %arg3: memref<8x36xbf16, #tpu.memory_space<vmem>>, %arg4: memref<8x1xf32, #tpu.memory_space<vmem>>, %arg5: memref<2x8x128xbf16, #tpu.memory_space<vmem>>, %arg6: memref<1x8x2xf32, #tpu.memory_space<vmem>>) attributes {dimension_semantics = [#tpu.dimension_semantics<parallel>, #tpu.dimension_semantics<arbitrary>], iteration_bounds = array<i64: 1, 4>, scalar_prefetch = 0 : i64, scratch_operands = 0 : i64, tpu.core_type = #tpu.core_type<tc>, window_params = [{transform_indices = @transform_0, window_bounds = array<i64: 1, 36, 128>}, {pipeline_mode = #tpu.pipeline_mode<synchronous>, transform_indices = @transform_1, window_bounds = array<i64: 8, 36>}, {pipeline_mode = #tpu.pipeline_mode<synchronous>, transform_indices = @transform_2, window_bounds = array<i64: 8, 1>}, {transform_indices = @transform_3, window_bounds = array<i64: 2, 8, 128>}, {transform_indices = @transform_4, window_bounds = array<i64: 1, 8, 2>}]} {
    %c0 = arith.constant 0 : index
    %c0_0 = arith.constant 0 : index
    %0 = vector.load %arg3[%c0, %c0_0] : memref<8x36xbf16, #tpu.memory_space<vmem>>, vector<8x36xbf16>
    %c0_1 = arith.constant 0 : index
    %c0_2 = arith.constant 0 : index
    %c0_3 = arith.constant 0 : index
    %1 = vector.load %arg2[%c0_1, %c0_2, %c0_3] : memref<1x36x128xbf16, #tpu.memory_space<vmem>>, vector<1x36x128xbf16>
    %2 = vector.shape_cast %1 : vector<1x36x128xbf16> to vector<36x128xbf16>
    %cst = arith.constant dense<0.000000e+00> : vector<8x128xf32>
    %3 = tpu.matmul %0, %2, %cst {dimension_numbers = #tpu.dot_dimension_numbers<[1], [0], [0], [1], [0, 0, 1, 1], [], []>} : vector<8x36xbf16>, vector<36x128xbf16>, vector<8x128xf32> -> vector<8x128xf32>
    %c0_4 = arith.constant 0 : index
    %c0_5 = arith.constant 0 : index
    %4 = vector.load %arg4[%c0_4, %c0_5] : memref<8x1xf32, #tpu.memory_space<vmem>>, vector<8x1xf32>
    %5 = vector.broadcast %4 : vector<8x1xf32> to vector<8x128xf32>
    %6 = arith.addf %3, %5 : vector<8x128xf32>
    %7 = arith.truncf %6 : vector<8x128xf32> to vector<8x128xbf16>
    %c0_i32 = arith.constant 0 : i32
    %8 = arith.cmpi eq, %arg1, %c0_i32 : i32
    %9 = arith.extui %8 : i1 to i32
    %c0_i32_6 = arith.constant 0 : i32
    %10 = arith.cmpi ne, %9, %c0_i32_6 : i32
    scf.if %10 {
      %c0_17 = arith.constant 0 : index
      %c0_18 = arith.constant 0 : index
      %c0_19 = arith.constant 0 : index
      %26 = vector.load %arg5[%c0_17, %c0_18, %c0_19] : memref<2x8x128xbf16, #tpu.memory_space<vmem>>, vector<1x8x128xbf16>
      %27 = vector.shape_cast %26 : vector<1x8x128xbf16> to vector<8x128xbf16>
      %28 = vector.shape_cast %7 : vector<8x128xbf16> to vector<1x8x128xbf16>
      tpu.vector_store %arg5[%c0_17, %c0_18, %c0_19], %28 {strides = array<i32>} : memref<2x8x128xbf16, #tpu.memory_space<vmem>>, vector<1x8x128xbf16>,
      %c1 = arith.constant 1 : index
      %c0_20 = arith.constant 0 : index
      %c0_21 = arith.constant 0 : index
      %29 = vector.load %arg5[%c1, %c0_20, %c0_21] : memref<2x8x128xbf16, #tpu.memory_space<vmem>>, vector<1x8x128xbf16>
      %30 = vector.shape_cast %29 : vector<1x8x128xbf16> to vector<8x128xbf16>
      %31 = vector.shape_cast %7 : vector<8x128xbf16> to vector<1x8x128xbf16>
      tpu.vector_store %arg5[%c1, %c0_20, %c0_21], %31 {strides = array<i32>} : memref<2x8x128xbf16, #tpu.memory_space<vmem>>, vector<1x8x128xbf16>,
      %cst_22 = arith.constant 0.000000e+00 : f32
      %32 = vector.broadcast %cst_22 : f32 to vector<8x2xf32>
      %c0_23 = arith.constant 0 : index
      %c0_24 = arith.constant 0 : index
      %c0_25 = arith.constant 0 : index
      %33 = vector.load %arg6[%c0_23, %c0_24, %c0_25] : memref<1x8x2xf32, #tpu.memory_space<vmem>>, vector<1x8x2xf32>
      %34 = vector.shape_cast %33 : vector<1x8x2xf32> to vector<8x2xf32>
      %35 = vector.shape_cast %32 : vector<8x2xf32> to vector<1x8x2xf32>
      tpu.vector_store %arg6[%c0_23, %c0_24, %c0_25], %35 {strides = array<i32>} : memref<1x8x2xf32, #tpu.memory_space<vmem>>, vector<1x8x2xf32>,
    } else {
    }
    %c0_i32_7 = arith.constant 0 : i32
    %11 = arith.cmpi sgt, %arg1, %c0_i32_7 : i32
    %12 = arith.extui %11 : i1 to i32
    %c0_i32_8 = arith.constant 0 : i32
    %13 = arith.cmpi ne, %12, %c0_i32_8 : i32
    scf.if %13 {
      %c0_17 = arith.constant 0 : index
      %c0_18 = arith.constant 0 : index
      %c0_19 = arith.constant 0 : index
      %26 = vector.load %arg5[%c0_17, %c0_18, %c0_19] : memref<2x8x128xbf16, #tpu.memory_space<vmem>>, vector<1x8x128xbf16>
      %27 = vector.shape_cast %26 : vector<1x8x128xbf16> to vector<8x128xbf16>
      %28 = arith.maximumf %27, %7 : vector<8x128xbf16>
      %c0_20 = arith.constant 0 : index
      %c0_21 = arith.constant 0 : index
      %c0_22 = arith.constant 0 : index
      %29 = vector.load %arg5[%c0_20, %c0_21, %c0_22] : memref<2x8x128xbf16, #tpu.memory_space<vmem>>, vector<1x8x128xbf16>
      %30 = vector.shape_cast %29 : vector<1x8x128xbf16> to vector<8x128xbf16>
      %31 = vector.shape_cast %28 : vector<8x128xbf16> to vector<1x8x128xbf16>
      tpu.vector_store %arg5[%c0_20, %c0_21, %c0_22], %31 {strides = array<i32>} : memref<2x8x128xbf16, #tpu.memory_space<vmem>>, vector<1x8x128xbf16>,
      %c1 = arith.constant 1 : index
      %c0_23 = arith.constant 0 : index
      %c0_24 = arith.constant 0 : index
      %32 = vector.load %arg5[%c1, %c0_23, %c0_24] : memref<2x8x128xbf16, #tpu.memory_space<vmem>>, vector<1x8x128xbf16>
      %33 = vector.shape_cast %32 : vector<1x8x128xbf16> to vector<8x128xbf16>
      %34 = arith.minimumf %33, %7 : vector<8x128xbf16>
      %c1_25 = arith.constant 1 : index
      %c0_26 = arith.constant 0 : index
      %c0_27 = arith.constant 0 : index
      %35 = vector.load %arg5[%c1_25, %c0_26, %c0_27] : memref<2x8x128xbf16, #tpu.memory_space<vmem>>, vector<1x8x128xbf16>
      %36 = vector.shape_cast %35 : vector<1x8x128xbf16> to vector<8x128xbf16>
      %37 = vector.shape_cast %34 : vector<8x128xbf16> to vector<1x8x128xbf16>
      tpu.vector_store %arg5[%c1_25, %c0_26, %c0_27], %37 {strides = array<i32>} : memref<2x8x128xbf16, #tpu.memory_space<vmem>>, vector<1x8x128xbf16>,
    } else {
    }
    %c0_9 = arith.constant 0 : index
    %c0_10 = arith.constant 0 : index
    %c0_11 = arith.constant 0 : index
    %14 = vector.load %arg6[%c0_9, %c0_10, %c0_11] : memref<1x8x2xf32, #tpu.memory_space<vmem>>, vector<1x8x2xf32>
    %15 = vector.shape_cast %14 : vector<1x8x2xf32> to vector<8x2xf32>
    %cst_12 = arith.constant dense<0.000000e+00> : vector<8xf32>
    %16 = vector.multi_reduction <add>, %6, %cst_12 [1] : vector<8x128xf32> to vector<8xf32>
    %17 = vector.shape_cast %16 : vector<8xf32> to vector<8x1xf32>
    %18 = arith.mulf %6, %6 : vector<8x128xf32>
    %cst_13 = arith.constant dense<0.000000e+00> : vector<8xf32>
    %19 = vector.multi_reduction <add>, %18, %cst_13 [1] : vector<8x128xf32> to vector<8xf32>
    %20 = vector.shape_cast %19 : vector<8xf32> to vector<8x1xf32>
    %21 = tpu.concatenate %17, %20 in 1 : vector<8x1xf32>, vector<8x1xf32> -> vector<8x2xf32>
    %22 = arith.addf %15, %21 : vector<8x2xf32>
    %c0_14 = arith.constant 0 : index
    %c0_15 = arith.constant 0 : index
    %c0_16 = arith.constant 0 : index
    %23 = vector.load %arg6[%c0_14, %c0_15, %c0_16] : memref<1x8x2xf32, #tpu.memory_space<vmem>>, vector<1x8x2xf32>
    %24 = vector.shape_cast %23 : vector<1x8x2xf32> to vector<8x2xf32>
    %25 = vector.shape_cast %22 : vector<8x2xf32> to vector<1x8x2xf32>
    tpu.vector_store %arg6[%c0_14, %c0_15, %c0_16], %25 {strides = array<i32>} : memref<1x8x2xf32, #tpu.memory_space<vmem>>, vector<1x8x2xf32>,
    return
  }
  func.func @transform_0(%arg0: i32, %arg1: i32) -> (i32, i32, i32) {
    %c0_i32 = arith.constant 0 : i32
    %c0_i32_0 = arith.constant 0 : i32
    return %arg1, %c0_i32, %arg0 : i32, i32, i32
  }
  func.func @transform_1(%arg0: i32, %arg1: i32) -> (i32, i32) {
    %c0_i32 = arith.constant 0 : i32
    %c0_i32_0 = arith.constant 0 : i32
    %c0_i32_1 = arith.constant 0 : i32
    return %c0_i32, %c0_i32_0 : i32, i32
  }
  func.func @transform_2(%arg0: i32, %arg1: i32) -> (i32, i32) {
    %c0_i32 = arith.constant 0 : i32
    %c0_i32_0 = arith.constant 0 : i32
    %c0_i32_1 = arith.constant 0 : i32
    return %c0_i32, %c0_i32_0 : i32, i32
  }
  func.func @transform_3(%arg0: i32, %arg1: i32) -> (i32, i32, i32) {
    %c0_i32 = arith.constant 0 : i32
    %c0_i32_0 = arith.constant 0 : i32
    %c0_i32_1 = arith.constant 0 : i32
    return %c0_i32, %c0_i32_0, %arg0 : i32, i32, i32
  }
  func.func @transform_4(%arg0: i32, %arg1: i32) -> (i32, i32, i32) {
    %c0_i32 = arith.constant 0 : i32
    %c0_i32_0 = arith.constant 0 : i32
    %c0_i32_1 = arith.constant 0 : i32
    return %arg0, %c0_i32, %c0_i32_0 : i32, i32, i32
  }
}

</mosaic_0001>

<llo_original>
// kernel: tpu_custom_call.1
$region0: #{tpu_custom_call.1}
  #allocation0 [shape = 'u32[]', space=smem, size = 0x4, offset = 0x4, fixed_abs, tag = 'smem constant byte address 0x4 - core index']
  #allocation1 [shape = 'u32[144,128]{1,0:T(1,128)}', space=vmem, size = 0x12000, scoped, tag = 'internal scratch']
  %s0 = inlined_call_operand.vmem [shape: bf16[4,36,128], index: 0, kind: input, shape index: {}]
  %s1 = inlined_call_operand.vmem [shape: bf16[8,36], index: 1, kind: input, shape index: {}]
  %s2 = inlined_call_operand.vmem [shape: f32[8,1], index: 2, kind: input, shape index: {}]
  %s3 = inlined_call_operand.hbm [shape: bf16[2,8,128], index: 3, kind: output, shape index: {0}]
  %s4 = inlined_call_operand.vmem [shape: f32[1,8,2], index: 4, kind: output, shape index: {1}]
  %5 = xla_tuple %s3, %s4
  %s6 = sld [smem:[#allocation0]]
  $region61: #{tpu_custom_call.1} parent=0
    _
  %s8 = ssub.s32 1, %s6
  %s9 = scalar_select 0, %s8, %s6
  $region1: #{tpu_custom_call.1} parent=0
    #allocation2 [shape = 'u8[4096]{0}', space=vmem, size = 0x1000, scoped, tag = 'output window, operand 0, single buffered']
    #allocation3 [shape = 's32[2]{0}', space=sflag, size = 0x8, scoped, tag = 'scoped memory for tpu_custom_call.1']
    %10 = vsyncpa [#allocation3], 0
    loop: start=0, step=1, limit=6
    $region2: #{tpu_custom_call.1} parent=1 // loop_pre_header
      _
    $region3: #{tpu_custom_call.1} parent=1 // loop_header
      %s12 = sphi 0, %s16
      %p13 = scmp.ge.s32.totalorder %s12, 6
      %s19 = sphi 0, %s31
      %s20 = sphi 0, %s27
      %s21 = sphi 0, %s19
      %s22 = sphi 0, %s20
      %s23 = sphi 0, %s21
      %s24 = sphi 0, %s22
      %s36 = sphi 0, %s38
      %s39 = sphi 0, %s36
      %s40 = sphi 0, %s39
      %s56 = sphi 0, %s40
      %s60 = sphi 0, %s60
      %s62 = sphi 0, %s60
      %s63 = sphi 0, %s62
      %s77 = sphi 0, %s63
      %s81 = sphi 0, %s81
      %s83 = sphi 0, %s81
      %s84 = sphi 0, %s83
      %s98 = sphi 0, %s84
      %s104 = sphi 0, %s106
      %s107 = sphi 0, %s104
      %s108 = sphi 0, %s107
      %s124 = sphi 0, %s108
      %s130 = sphi 0, %s132
      %s133 = sphi 0, %s130
      %s134 = sphi 0, %s133
      %s150 = sphi 0, %s134
    $region4: #{tpu_custom_call.1} parent=1 // loop_header_branch
      %15 = sbr.rel (%p13) target = $region8
    $region5: #{tpu_custom_call.1} parent=1 // loop_body
      %s17 = ssub.s32 %s12, 1
      %s18 = ssub.s32 %s12, 2
      %s25 = sadd.s32 1, %s20
      %p26 = scmp.ge.s32.totalorder %s25, 4
      %s27 = scalar_select %p26, 0, %s25
      %s28 = sadd.s32 1, %s19
      %s29 = scalar_select %p26, %s28, %s19
      %p30 = scmp.ge.s32.totalorder %s29, 1
      %s31 = scalar_select %p30, 0, %s29
      %s32 = ssub.s32 %s20, %s27
      %s33 = ssub.s32 %s19, %s31
      %s34 = sor.u32 %s32, %s33
      %p35 = scmp.eq.s32.totalorder %s34, 0
      %s37 = sadd.s32 %s36, 1
      %s38 = scalar_select %p35, %s36, %s37
      %p41 = pneg %p35
      %p42 = scmp.eq.s32.totalorder %s12, 3
      %p43 = por %p41, %p42
      %p44 = scmp.ne.s32.totalorder %s36, %s39
      %p45 = scmp.eq.s32.totalorder %s12, 0
      %p46 = por %p44, %p45
      %p47 = scmp.ne.s32.totalorder %s36, %s39
      %p48 = scmp.eq.s32.totalorder %s17, 3
      %p49 = por %p47, %p48
      %p50 = scmp.ne.s32.totalorder %s39, %s40
      %p51 = scmp.eq.s32.totalorder %s17, 0
      %p52 = por %p50, %p51
      %p53 = scmp.ne.s32.totalorder %s39, %s40
      %p54 = scmp.eq.s32.totalorder %s18, 3
      %p55 = por %p53, %p54
      %p57 = scmp.ne.s32.totalorder %s40, %s56
      %p58 = scmp.eq.s32.totalorder %s18, 0
      %p59 = por %p57, %p58
      %s61 = sadd.s32 %s60, 1
      %p64 = scmp.eq.s32.totalorder %s12, 3
      %p65 = scmp.ne.s32.totalorder %s60, %s62
      %p66 = scmp.eq.s32.totalorder %s12, 0
      %p67 = por %p65, %p66
      %p68 = scmp.ne.s32.totalorder %s60, %s62
      %p69 = scmp.eq.s32.totalorder %s17, 3
      %p70 = por %p68, %p69
      %p71 = scmp.ne.s32.totalorder %s62, %s63
      %p72 = scmp.eq.s32.totalorder %s17, 0
      %p73 = por %p71, %p72
      %p74 = scmp.ne.s32.totalorder %s62, %s63
      %p75 = scmp.eq.s32.totalorder %s18, 3
      %p76 = por %p74, %p75
      %p78 = scmp.ne.s32.totalorder %s63, %s77
      %p79 = scmp.eq.s32.totalorder %s18, 0
      %p80 = por %p78, %p79
      %s82 = sadd.s32 %s81, 1
      %p85 = scmp.eq.s32.totalorder %s12, 3
      %p86 = scmp.ne.s32.totalorder %s81, %s83
      %p87 = scmp.eq.s32.totalorder %s12, 0
      %p88 = por %p86, %p87
      %p89 = scmp.ne.s32.totalorder %s81, %s83
      %p90 = scmp.eq.s32.totalorder %s17, 3
      %p91 = por %p89, %p90
      %p92 = scmp.ne.s32.totalorder %s83, %s84
      %p93 = scmp.eq.s32.totalorder %s17, 0
      %p94 = por %p92, %p93
      %p95 = scmp.ne.s32.totalorder %s83, %s84
      %p96 = scmp.eq.s32.totalorder %s18, 3
      %p97 = por %p95, %p96
      %p99 = scmp.ne.s32.totalorder %s84, %s98
      %p100 = scmp.eq.s32.totalorder %s18, 0
      %p101 = por %p99, %p100
      %s102 = ssub.s32 %s19, %s31
      %p103 = scmp.eq.s32.totalorder %s102, 0
      %s105 = sadd.s32 %s104, 1
      %s106 = scalar_select %p103, %s104, %s105
      %p109 = pneg %p103
      %p110 = scmp.eq.s32.totalorder %s12, 3
      %p111 = por %p109, %p110
      %p112 = scmp.ne.s32.totalorder %s104, %s107
      %p113 = scmp.eq.s32.totalorder %s12, 0
      %p114 = por %p112, %p113
      %p115 = scmp.ne.s32.totalorder %s104, %s107
      %p116 = scmp.eq.s32.totalorder %s17, 3
      %p117 = por %p115, %p116
      %p118 = scmp.ne.s32.totalorder %s107, %s108
      %p119 = scmp.eq.s32.totalorder %s17, 0
      %p120 = por %p118, %p119
      %p121 = scmp.ne.s32.totalorder %s107, %s108
      %p122 = scmp.eq.s32.totalorder %s18, 3
      %p123 = por %p121, %p122
      %p125 = scmp.ne.s32.totalorder %s108, %s124
      %p126 = scmp.eq.s32.totalorder %s18, 0
      %p127 = por %p125, %p126
      %s128 = ssub.s32 %s19, %s31
      %p129 = scmp.eq.s32.totalorder %s128, 0
      %s131 = sadd.s32 %s130, 1
      %s132 = scalar_select %p129, %s130, %s131
      %p135 = pneg %p129
      %p136 = scmp.eq.s32.totalorder %s12, 3
      %p137 = por %p135, %p136
      %p138 = scmp.ne.s32.totalorder %s130, %s133
      %p139 = scmp.eq.s32.totalorder %s12, 0
      %p140 = por %p138, %p139
      %p141 = scmp.ne.s32.totalorder %s130, %s133
      %p142 = scmp.eq.s32.totalorder %s17, 3
      %p143 = por %p141, %p142
      %p144 = scmp.ne.s32.totalorder %s133, %s134
      %p145 = scmp.eq.s32.totalorder %s17, 0
      %p146 = por %p144, %p145
      %p147 = scmp.ne.s32.totalorder %s133, %s134
      %p148 = scmp.eq.s32.totalorder %s18, 3
      %p149 = por %p147, %p148
      %p151 = scmp.ne.s32.totalorder %s134, %s150
      %p152 = scmp.eq.s32.totalorder %s18, 0
      %p153 = por %p151, %p152
      %p154 = scmp.le.s32.totalorder 1, %s12
      %p155 = scmp.lt.s32.totalorder %s12, 5
      %p156 = pnand %p154, %p155
      %p157 = pneg %p156
      // Predicated region
      $region9: #{tpu_custom_call.1} parent=5 // pred_check
        _
      $region10: #{tpu_custom_call.1} parent=5 // pred_check_branch
        %159 = sbr.rel (%p156) target = $region12
      $region11: #{tpu_custom_call.1} parent=5 // pred_region
        %s160 = ssub.s32 %s12, 1
        // Predicated region
        $region13: #{tpu_custom_call.1} parent=11 // pred_check
          %p161 = pneg %p73
        $region14: #{tpu_custom_call.1} parent=11 // pred_check_branch
          %163 = sbr.rel (%p161) target = $region16
        $region15: #{tpu_custom_call.1} parent=11 // pred_region
          _
        $region16: #{tpu_custom_call.1} parent=11 // pred_fallthru
          _
        // Predicated region
        $region17: #{tpu_custom_call.1} parent=11 // pred_check
          %p164 = pneg %p94
        $region18: #{tpu_custom_call.1} parent=11 // pred_check_branch
          %166 = sbr.rel (%p164) target = $region20
        $region19: #{tpu_custom_call.1} parent=11 // pred_region
          _
        $region20: #{tpu_custom_call.1} parent=11 // pred_fallthru
          _
      $region12: #{tpu_custom_call.1} parent=5 // pred_fallthru
        _
      %p167 = scmp.lt.s32.totalorder %s12, 4
      // Predicated region
      $region21: #{tpu_custom_call.1} parent=5 // pred_check
        %p168 = pneg %p167
      $region22: #{tpu_custom_call.1} parent=5 // pred_check_branch
        %170 = sbr.rel (%p168) target = $region24
      $region23: #{tpu_custom_call.1} parent=5 // pred_region
        // Predicated region
        $region25: #{tpu_custom_call.1} parent=23 // pred_check
          %p171 = pneg %p46
        $region26: #{tpu_custom_call.1} parent=23 // pred_check_branch
          %173 = sbr.rel (%p171) target = $region28
        $region27: #{tpu_custom_call.1} parent=23 // pred_region
          %p174 = scmp.lt.s32.totalorder %s20, 3
          %s175 = scalar_select %p174, %s20, 3
          %p176 = scmp.lt.s32.totalorder %s19, 0
          %s177 = scalar_select %p176, %s19, 0
          %s178 = smul.addr %s175, 5
          %s179 = sadd.s32 %s177, %s178
          %s180 = smul.addr %s179, 4
          %s181 = scalar_lea.vmem %s0, %s180
        $region28: #{tpu_custom_call.1} parent=23 // pred_fallthru
          _
      $region24: #{tpu_custom_call.1} parent=5 // pred_fallthru
        _
      %p182 = scmp.le.s32.totalorder 1, %s12
      %p183 = scmp.lt.s32.totalorder %s12, 5
      %p184 = pnand %p182, %p183
      %p185 = pneg %p184
      // Predicated region
      $region29: #{tpu_custom_call.1} parent=5 // pred_check
        _
      $region30: #{tpu_custom_call.1} parent=5 // pred_check_branch
        %187 = sbr.rel (%p184) target = $region32
      $region31: #{tpu_custom_call.1} parent=5 // pred_region
        %s188 = ssub.s32 %s12, 1
        %p189 = scmp.lt.s32.totalorder %s22, 3
        %s190 = scalar_select %p189, %s22, 3
        %p191 = scmp.lt.s32.totalorder %s21, 0
        %s192 = scalar_select %p191, %s21, 0
        %s193 = smul.addr %s190, 5
        %s194 = sadd.s32 %s192, %s193
        %s195 = smul.addr %s194, 4
        %s196 = scalar_lea.vmem %s0, %s195
        %p197 = pneg %p52
        %p198 = pneg %p49
        %p199 = pneg %p73
        %p200 = pneg %p70
        %p201 = pneg %p94
        %p202 = pneg %p91
        %p203 = pneg %p120
        %p204 = pneg %p117
        %p205 = pneg %p146
        %p206 = pneg %p143
        %p207 = scmp.lt.s32.totalorder %s21, 0
        %s208 = scalar_select %p207, %s21, 0
        %s209 = smul.addr %s208, 8
        %s210 = scalar_lea.vmem %s4, %s209
        %p211 = scmp.lt.s32.totalorder %s22, 3
        %s212 = scalar_select %p211, %s22, 3
        %p213 = scmp.lt.s32.totalorder %s21, 0
        %s214 = scalar_select %p213, %s21, 0
        %s215 = smul.addr %s212, 5
        %s216 = sadd.s32 %s214, %s215
        %s217 = smul.addr %s216, 4
        %s218 = scalar_lea.vmem %s0, %s217
        %p219 = scmp.lt.s32.totalorder %s21, 0
        %s220 = scalar_select %p219, %s21, 0
        %s221 = smul.addr %s220, 8
        %s222 = scalar_lea.vmem %s4, %s221
        %v224 = vld [vmem:[%s1] sm:$0xf]
        %v225 = vld [vmem:[%s218] sm:$0xf]
        %v226 = vld [vmem:[%s218 + $0x4] sm:$0xf]
        %v227 = vld [vmem:[%s218 + $0x8] sm:$0xf]
        %v228 = vld [vmem:[%s218 + $0xc] sm:$0xf]
        %v229 = vld [vmem:[%s218 + $0x10] sm:$0x3]
        %v230 = vld [vmem:[%s2] sm:$0xff]
        %232 = vset.pattern.permute.xlu0 0
        %233 = vperm.xlu0 %232, %v230
        %v234 = vpop.permute.xlu0 %233
        %v241 = vunpack.c.l.b16 %v225
        %v242 = vunpack.c.l.b16 %v226
        %v243 = vunpack.c.l.b16 %v227
        %v244 = vunpack.c.l.b16 %v228
        %v245 = vunpack.c.l.b16 %v229
        %v246 = vpack.c.b16 %v242, %v241
        %v247 = vpack.c.b16 %v244, %v243
        %v248 = vpack.c.b16 %v245, %v245
        %vm251 = vcmask 293888
        %v253 = vsel %vm251, %v224, 0
        %vm255 = vcmask 1041408
        %v257 = vsel %vm255, %v248, 0
        %259 = vmatprep.subr.bf16.mxu0 0
        %260 = vmatpush1.bf16.msra.mxu0 0
        %261 = vmatprep.subr.bf16.mxu0 0
        %262 = vmatpush1.bf16.msra.mxu0 0
        %263 = vmatprep.subr.bf16.mxu0 0
        %264 = vmatpush1.bf16.msra.mxu0 0
        %265 = vmatprep.subr.bf16.mxu0 0
        %266 = vmatpush1.bf16.msra.mxu0 0
        %267 = vmatprep.subr.bf16.mxu0 0
        %268 = vmatpush1.bf16.msra.mxu0 0
        %269 = vmatprep.subr.bf16.mxu0 0
        %270 = vmatpush1.bf16.msra.mxu0 %v257
        %271 = vmatprep.subr.bf16.mxu0 0
        %272 = vmatpush1.bf16.msra.mxu0 %v247
        %273 = vmatprep.subr.bf16.mxu0 0
        %274 = vmatpush1.bf16.msra.mxu0 %v246
        %275 = vmatprep.subr.bf16.mxu0 0
        %276 = vmatpush2.bf16.msra.mxu0 0
        %277 = vmatprep.subr.bf16.mxu0 0
        %278 = vmatpush2.bf16.msra.mxu0 0
        %279 = vmatprep.subr.bf16.mxu0 0
        %280 = vmatpush2.bf16.msra.mxu0 0
        %281 = vmatprep.subr.bf16.mxu0 0
        %282 = vmatpush2.bf16.msra.mxu0 0
        %283 = vmatprep.subr.bf16.mxu0 0
        %284 = vmatpush2.bf16.msra.mxu0 0
        %285 = vmatprep.subr.bf16.mxu0 0
        %286 = vmatpush2.bf16.msra.mxu0 0
        %287 = vmatprep.subr.bf16.mxu0 0
        %288 = vmatpush2.bf16.msra.mxu0 0
        %289 = vmatprep.subr.bf16.mxu0 0
        %290 = vmatpush2.bf16.msra.mxu0 0
        %291 = vmatprep.mubr.bf16.mxu0 0
        %292 = vmatmul.mubr.bf16.gmra.mxu0 %v253
        %v293 = vpop.f32.mrf.mxu0
        %v294 = vadd.f32 %v234, %v293
        %v295 = vpop.f32.mrf.mxu0
        %v296 = vpop.f32.mrf.mxu0
        %v297 = vpop.f32.mrf.mxu0
        %298 = vdwg.mxu0
        %v299 = vpack.c.bf16 %v294, %v294
        %p300 = scmp.eq.s32.totalorder %s22, 0
        // Predicated region
        $region33: #{tpu_custom_call.1} parent=31 // pred_check
          %p301 = pneg %p300
        $region34: #{tpu_custom_call.1} parent=31 // pred_check_branch
          %303 = sbr.rel (%p301) target = $region36
        $region35: #{tpu_custom_call.1} parent=31 // pred_region
          %304 = vst [vmem:[#allocation2] sm:$0xf] %v299
          %s305 = scalar_lea.vmem [#allocation2], 4
          %306 = vst [vmem:[%s305] sm:$0xf] %v299
          %vm307 = vcmask 15360
          %308 = vst.msk [vmem:[%s222] sm:$0xff] %vm307, 0.0
        $region36: #{tpu_custom_call.1} parent=31 // pred_fallthru
          _
        %p309 = scmp.gt.s32.totalorder %s22, 0
        // Predicated region
        $region37: #{tpu_custom_call.1} parent=31 // pred_check
          %p310 = pneg %p309
        $region38: #{tpu_custom_call.1} parent=31 // pred_check_branch
          %312 = sbr.rel (%p310) target = $region40
        $region39: #{tpu_custom_call.1} parent=31 // pred_region
          %v313 = vld [vmem:[#allocation2] sm:$0xf]
          %v314 = vmax.bf16 %v313, %v299
          %315 = vst [vmem:[#allocation2] sm:$0xf] %v314
          %s316 = scalar_lea.vmem [#allocation2], 4
          %v317 = vld [vmem:[%s316] sm:$0xf]
          %v318 = vmin.bf16 %v317, %v299
          %319 = vst [vmem:[%s316] sm:$0xf] %v318
        $region40: #{tpu_custom_call.1} parent=31 // pred_fallthru
          _
        %v320 = vld [vmem:[%s222] sm:$0xff]
        %321 = vadd.xlane.f32.xlu0 %v294
        %v322 = vpop.xlane.xlu0 %321
        %v323 = vmul.f32 %v294, %v294
        %324 = vadd.xlane.f32.xlu0 %v323
        %v325 = vpop.xlane.xlu0 %324
        %vm326 = vcmask 7168
        %v327 = vsel %vm326, %v322, %v325
        %v328 = vadd.f32 %v320, %v327
        %vm329 = vcmask 15360
        %330 = vst.msk [vmem:[%s222] sm:$0xff] %vm329, %v328
        %p331 = scmp.lt.s32.totalorder %s21, 0
        %s332 = scalar_select %p331, %s21, 0
        %s333 = smul.addr %s332, 8
        %s334 = scalar_lea.vmem %s4, %s333
        // Predicated region
        $region41: #{tpu_custom_call.1} parent=31 // pred_check
          %p335 = pneg %p117
        $region42: #{tpu_custom_call.1} parent=31 // pred_check_branch
          %337 = sbr.rel (%p335) target = $region44
        $region43: #{tpu_custom_call.1} parent=31 // pred_region
          %s339 = ssub.s32 128, 128
          %340 = vsyncadd [#allocation3], %s339
          %s341 = smul.addr %s21, 64
          %s342 = scalar_lea.hbm %s3, %s341
          %s343 = sshll.u32 [#allocation2], 4
          %s344 = int_to_ptr.vmem [resolvable:$true] %s343
          %349 = dma.vmem_to_hbm [thread:$0]  %s344, 128, %s342, [#allocation3], 64, 64, 4
        $region44: #{tpu_custom_call.1} parent=31 // pred_fallthru
          _
        // Predicated region
        $region45: #{tpu_custom_call.1} parent=31 // pred_check
          %p350 = pneg %p143
        $region46: #{tpu_custom_call.1} parent=31 // pred_check_branch
          %352 = sbr.rel (%p350) target = $region48
        $region47: #{tpu_custom_call.1} parent=31 // pred_region
          _
        $region48: #{tpu_custom_call.1} parent=31 // pred_fallthru
          _
        // Predicated region
        $region49: #{tpu_custom_call.1} parent=31 // pred_check
          %p353 = pneg %p117
        $region50: #{tpu_custom_call.1} parent=31 // pred_check_branch
          %355 = sbr.rel (%p353) target = $region52
        $region51: #{tpu_custom_call.1} parent=31 // pred_region
          %356 = dma.done [#allocation3], 128
        $region52: #{tpu_custom_call.1} parent=31 // pred_fallthru
          _
        // Predicated region
        $region53: #{tpu_custom_call.1} parent=31 // pred_check
          %p357 = pneg %p143
        $region54: #{tpu_custom_call.1} parent=31 // pred_check_branch
          %359 = sbr.rel (%p357) target = $region56
        $region55: #{tpu_custom_call.1} parent=31 // pred_region
          %p360 = scmp.lt.s32.totalorder %s21, 0
          %s361 = scalar_select %p360, %s21, 0
          %s362 = smul.addr %s361, 8
          %s363 = scalar_lea.vmem %s4, %s362
        $region56: #{tpu_custom_call.1} parent=31 // pred_fallthru
          _
      $region32: #{tpu_custom_call.1} parent=5 // pred_fallthru
        _
      %p364 = scmp.le.s32.totalorder 2, %s12
      // Predicated region
      $region57: #{tpu_custom_call.1} parent=5 // pred_check
        %p365 = pneg %p364
      $region58: #{tpu_custom_call.1} parent=5 // pred_check_branch
        %367 = sbr.rel (%p365) target = $region60
      $region59: #{tpu_custom_call.1} parent=5 // pred_region
        %s368 = ssub.s32 %s12, 2
      $region60: #{tpu_custom_call.1} parent=5 // pred_fallthru
        _
    $region6: #{tpu_custom_call.1} parent=1 // loop_footer
      %s16 = sadd.s32 1, %s12
    $region7: #{tpu_custom_call.1} parent=1 // loop_footer_branch
      %11 = sbr.rel target = $region3
    $region8: #{tpu_custom_call.1} parent=1 // loop_exit
      _
    %369 = vsyncpa [#allocation3], 1
    %s370 = scalar_lea.sflag [#allocation3], 1
    %371 = vsyncpa %s370, 1

</llo_original>
